<compile_context>
chip_gen: v5e
topology: v5e:2x2
jax: 0.10.0
libtpu: 0.0.40
codegen_flags: <defaults>
</compile_context>

<pallas_src>
import functools

import jax
import jax.numpy as jnp
from jax import lax
from jax.experimental import pallas as pl
from jax.experimental.pallas import tpu as pltpu

_MIB = 1024 * 1024


def _round_up(x: int, m: int) -> int:
    return ((x + m - 1) // m) * m


def _vmem_limit_bytes() -> int:
    """Per-generation scoped-VMEM limit (defaults are too small for big tiles)."""
    phys = None
    try:
        info = pltpu.get_tpu_info()
        for attr in ("vmem_capacity_bytes", "vmem_size_bytes", "vmem_bytes"):
            cap = getattr(info, attr, None)
            if cap:
                phys = int(cap)
                break
    except Exception:
        phys = None
    if phys is None:
        phys = 64 * _MIB                 # assume the smallest (v7x per-TC) part
    if phys >= 96 * _MIB:                # v5e / v6e: 128 MiB physical VMEM
        return 64 * _MIB
    return 44 * _MIB                     # v7x: 64 MiB physical per TensorCore


def _choose_tiles(batch, hidden, n_out, x_itemsize, w_itemsize, out_itemsize,
                  vmem_limit, force_tile_k=None):
    """Pick (tile_b, tile_k). tile_k == hidden means W stays fully resident."""
    # Physical VMEM footprints are padded to (8, 128) tiles.
    n_lanes = _round_up(max(n_out, 1), 128)
    w_rows = _round_up(max(n_out, 1), 8)

    # --- tile_k: keep W fully resident unless its double-buffered slab is big.
    if force_tile_k is not None:
        tile_k = min(int(force_tile_k), hidden)
    elif 2 * w_rows * _round_up(hidden, 128) * w_itemsize <= 8 * _MIB:
        tile_k = hidden
    else:
        tile_k = (4 * _MIB) // (w_rows * w_itemsize)
        tile_k = max(512, (tile_k // 128) * 128)     # multiple of 128 lanes
        tile_k = min(tile_k, hidden)
    multi_k = tile_k < hidden

    # --- tile_b from the per-generation VMEM budget.
    x_cols = _round_up(tile_k, 128)
    per_row = (2 * x_cols * x_itemsize               # x, double buffered
               + 2 * n_lanes * out_itemsize)         # out, double buffered
    if multi_k:
        per_row += n_lanes * 4                       # f32 accumulator scratch
    fixed = (2 * w_rows * _round_up(tile_k, 128) * w_itemsize   # W blocks
             + 2 * 8 * n_lanes * 4)                             # bias blocks
    budget = int(vmem_limit * 0.8)                   # headroom for internals
    tile_b = max(8, (budget - fixed) // per_row)
    tile_b = min(tile_b, 4096)

    if batch < 8:
        return batch, tile_k           # single block == full array dim (legal)
    # Ensure >= 2 batch blocks so the "parallel" axis shards v7x's 2 TCs.
    half = _round_up(-(-batch // 2), 8)
    tile_b = min(tile_b, half)
    tile_b = max(8, (tile_b // 8) * 8)
    tile_b = min(tile_b, (batch // 8) * 8)   # block extent never exceeds array
    return tile_b, tile_k


def _head_kernel_single(x_ref, w_ref, b_ref, o_ref, *, regression, cast_bf16):
    """Single K step: dot -> +bias -> (sigmoid) -> store. No scratch."""
    x = x_ref[...]
    w = w_ref[...]
    if cast_bf16:
        x = x.astype(jnp.bfloat16)
        w = w.astype(jnp.bfloat16)
    # x:[TB,H] contracted with W:[N,H] along H (trans_b), f32 MXU accumulation.
    y = lax.dot_general(x, w, dimension_numbers=(((1,), (1,)), ((), ())),
                        preferred_element_type=jnp.float32)
    y = y + b_ref[...].astype(jnp.float32)
    if not regression:
        y = jax.nn.sigmoid(y)
    o_ref[...] = y.astype(o_ref.dtype)


def _head_kernel_multi(x_ref, w_ref, b_ref, o_ref, acc_ref, *, regression,
                       cast_bf16, hidden, tile_k):
    """K-tiled path (large hidden): f32 accumulator, masked ragged last block."""
    k = pl.program_id(1)

    @pl.when(k == 0)
    def _():
        acc_ref[...] = jnp.zeros_like(acc_ref)

    x = x_ref[...]
    w = w_ref[...]
    if hidden % tile_k != 0:
        # Ragged last K block: OOB columns are unspecified (could be NaN/Inf),
        # so zero them on both operands before the dot.
        col_x = k * tile_k + lax.broadcasted_iota(jnp.int32, x.shape, 1)
        x = jnp.where(col_x < hidden, x, jnp.zeros_like(x))
        col_w = k * tile_k + lax.broadcasted_iota(jnp.int32, w.shape, 1)
        w = jnp.where(col_w < hidden, w, jnp.zeros_like(w))
    if cast_bf16:
        x = x.astype(jnp.bfloat16)
        w = w.astype(jnp.bfloat16)

    acc_ref[...] += lax.dot_general(x, w,
                                    dimension_numbers=(((1,), (1,)), ((), ())),
                                    preferred_element_type=jnp.float32)

    @pl.when(k == pl.num_programs(1) - 1)
    def _():
        y = acc_ref[...] + b_ref[...].astype(jnp.float32)
        if not regression:
            y = jax.nn.sigmoid(y)
        o_ref[...] = y.astype(o_ref.dtype)


def finetuning_head(x: jax.Array, weight: jax.Array, bias: jax.Array,
                    regression: bool, *, use_bf16_matmul: bool = False,
                    _force_tile_k=None) -> jax.Array:
    """x: [B, H]; weight: [N, H] (PyTorch nn.Linear layout); bias: [N]."""
    B, H = x.shape
    N, H_w = weight.shape
    assert H == H_w and bias.shape == (N,)

    vmem_limit = _vmem_limit_bytes()
    tile_b, tile_k = _choose_tiles(
        B, H, N,
        jnp.dtype(x.dtype).itemsize, jnp.dtype(weight.dtype).itemsize,
        jnp.dtype(x.dtype).itemsize, vmem_limit, force_tile_k=_force_tile_k)

    bias2 = bias.reshape(1, N)
    grid_b = pl.cdiv(B, tile_b)
    grid_k = pl.cdiv(H, tile_k)

    if grid_k == 1:
        kernel = functools.partial(_head_kernel_single, regression=regression,
                                   cast_bf16=use_bf16_matmul)
        grid = (grid_b,)
        in_specs = [
            pl.BlockSpec((tile_b, H), lambda i: (i, 0)),   # x batch tile
            pl.BlockSpec((N, H), lambda i: (0, 0)),        # W, fully resident
            pl.BlockSpec((1, N), lambda i: (0, 0)),        # bias, resident
        ]
        out_specs = pl.BlockSpec((tile_b, N), lambda i: (i, 0))
        scratch_shapes = []
        dim_sem = ("parallel",)
    else:
        kernel = functools.partial(_head_kernel_multi, regression=regression,
                                   cast_bf16=use_bf16_matmul, hidden=H,
                                   tile_k=tile_k)
        grid = (grid_b, grid_k)
        in_specs = [
            pl.BlockSpec((tile_b, tile_k), lambda i, k: (i, k)),  # x tile
            pl.BlockSpec((N, tile_k), lambda i, k: (0, k)),       # W K-slice
            pl.BlockSpec((1, N), lambda i, k: (0, 0)),            # bias
        ]
        out_specs = pl.BlockSpec((tile_b, N), lambda i, k: (i, 0))
        scratch_shapes = [pltpu.VMEM((tile_b, N), jnp.float32)]
        dim_sem = ("parallel", "arbitrary")

    return pl.pallas_call(
        kernel,
        out_shape=jax.ShapeDtypeStruct((B, N), x.dtype),
        grid=grid,
        in_specs=in_specs,
        out_specs=out_specs,
        scratch_shapes=scratch_shapes,
        compiler_params=pltpu.CompilerParams(
            dimension_semantics=dim_sem,
            vmem_limit_bytes=vmem_limit),
    )(x, weight, bias2)


if __name__ == "__main__":
    key = jax.random.PRNGKey(0)

    def make(k, B, H, N):
        kx, kw, kb = jax.random.split(k, 3)
        bound = 1.0 / (H ** 0.5)  # mimic nn.Linear's uniform(-1/sqrt(H), 1/sqrt(H))
        x = jax.random.normal(kx, (B, H), dtype=jnp.float32)
        w = jax.random.uniform(kw, (N, H), minval=-bound, maxval=bound,
                               dtype=jnp.float32)
        b = jax.random.uniform(kb, (N,), minval=-bound, maxval=bound,
                               dtype=jnp.float32)
        return x, w, b

    def ref(x, w, b, regression):
        y = x @ w.T + b
        return y if regression else jax.nn.sigmoid(y)

    k1, k2 = jax.random.split(key)

    # Case 1: classification head (sigmoid), common single-K fast path.
    x, w, b = make(k1, 8, 32, 4)
    out = jax.block_until_ready(finetuning_head(x, w, b, regression=False))
    assert out.shape == (8, 4)
    assert jnp.allclose(out, ref(x, w, b, False), atol=1e-5, rtol=1e-5), \
        "mismatch vs reference (single-K path)"

    # Case 2: regression head, exercising the K-tiled accumulator path with a
    # ragged batch block (B=20, tile_b=16) and ragged last K block (H=300, tk=128).
    x2, w2, b2 = make(k2, 20, 300, 4)
    out2 = jax.block_until_ready(
        finetuning_head(x2, w2, b2, regression=True, _force_tile_k=128))
    assert out2.shape == (20, 4)
    assert jnp.allclose(out2, ref(x2, w2, b2, True), atol=1e-4, rtol=1e-4), \
        "mismatch vs reference (multi-K path)"

    print("KERNEL_OK")
</pallas_src>

<mosaic_0001>
module attributes {stable_mosaic.version = 11 : i64} {
  func.func @_head_kernel_single(%arg0: i32, %arg1: memref<8x32xf32, #tpu.memory_space<vmem>>, %arg2: memref<4x32xf32, #tpu.memory_space<vmem>>, %arg3: memref<1x4xf32, #tpu.memory_space<vmem>>, %arg4: memref<8x4xf32, #tpu.memory_space<vmem>>) attributes {dimension_semantics = [#tpu.dimension_semantics<parallel>], iteration_bounds = array<i64: 1>, scalar_prefetch = 0 : i64, scratch_operands = 0 : i64, tpu.core_type = #tpu.core_type<tc>, window_params = [{transform_indices = @transform_0, window_bounds = array<i64: 8, 32>}, {pipeline_mode = #tpu.pipeline_mode<synchronous>, transform_indices = @transform_1, window_bounds = array<i64: 4, 32>}, {pipeline_mode = #tpu.pipeline_mode<synchronous>, transform_indices = @transform_2, window_bounds = array<i64: 1, 4>}, {transform_indices = @transform_3, window_bounds = array<i64: 8, 4>}]} {
    %c0 = arith.constant 0 : index
    %c0_0 = arith.constant 0 : index
    %0 = vector.load %arg1[%c0, %c0_0] : memref<8x32xf32, #tpu.memory_space<vmem>>, vector<8x32xf32>
    %c0_1 = arith.constant 0 : index
    %c0_2 = arith.constant 0 : index
    %1 = vector.load %arg2[%c0_1, %c0_2] : memref<4x32xf32, #tpu.memory_space<vmem>>, vector<4x32xf32>
    %cst = arith.constant dense<0.000000e+00> : vector<8x4xf32>
    %2 = tpu.matmul %0, %1, %cst {dimension_numbers = #tpu.dot_dimension_numbers<[1], [1], [0], [0], [0, 0, 1, 0], [], []>} : vector<8x32xf32>, vector<4x32xf32>, vector<8x4xf32> -> vector<8x4xf32>
    %c0_3 = arith.constant 0 : index
    %c0_4 = arith.constant 0 : index
    %3 = vector.load %arg3[%c0_3, %c0_4] : memref<1x4xf32, #tpu.memory_space<vmem>>, vector<1x4xf32>
    %4 = vector.broadcast %3 : vector<1x4xf32> to vector<8x4xf32>
    %5 = arith.addf %2, %4 : vector<8x4xf32>
    %6 = arith.negf %5 : vector<8x4xf32>
    %7 = math.exp %6 : vector<8x4xf32>
    %cst_5 = arith.constant 1.000000e+00 : f32
    %8 = vector.broadcast %cst_5 : f32 to vector<8x4xf32>
    %9 = arith.addf %8, %7 : vector<8x4xf32>
    %10 = arith.divf %8, %9 : vector<8x4xf32>
    %c0_6 = arith.constant 0 : index
    %c0_7 = arith.constant 0 : index
    %11 = vector.load %arg4[%c0_6, %c0_7] : memref<8x4xf32, #tpu.memory_space<vmem>>, vector<8x4xf32>
    tpu.vector_store %arg4[%c0_6, %c0_7], %10 {strides = array<i32>} : memref<8x4xf32, #tpu.memory_space<vmem>>, vector<8x4xf32>,
    return
  }
  func.func @transform_0(%arg0: i32) -> (i32, i32) {
    %c0_i32 = arith.constant 0 : i32
    %c0_i32_0 = arith.constant 0 : i32
    return %arg0, %c0_i32 : i32, i32
  }
  func.func @transform_1(%arg0: i32) -> (i32, i32) {
    %c0_i32 = arith.constant 0 : i32
    %c0_i32_0 = arith.constant 0 : i32
    %c0_i32_1 = arith.constant 0 : i32
    return %c0_i32, %c0_i32_0 : i32, i32
  }
  func.func @transform_2(%arg0: i32) -> (i32, i32) {
    %c0_i32 = arith.constant 0 : i32
    %c0_i32_0 = arith.constant 0 : i32
    %c0_i32_1 = arith.constant 0 : i32
    return %c0_i32, %c0_i32_0 : i32, i32
  }
  func.func @transform_3(%arg0: i32) -> (i32, i32) {
    %c0_i32 = arith.constant 0 : i32
    %c0_i32_0 = arith.constant 0 : i32
    return %arg0, %c0_i32 : i32, i32
  }
}

</mosaic_0001>

<llo_original>
// kernel: tpu_custom_call.1
$region0: #{tpu_custom_call.1}
  #allocation0 [shape = 'u32[]', space=smem, size = 0x4, offset = 0x4, fixed_abs, tag = 'smem constant byte address 0x4 - core index']
  #allocation1 [shape = 'u32[72,128]{1,0:T(1,128)}', space=vmem, size = 0x9000, scoped, tag = 'internal scratch']
  %s0 = inlined_call_operand.hbm [shape: f32[8,32], index: 0, kind: input, shape index: {}]
  %s1 = inlined_call_operand.hbm [shape: f32[4,32], index: 1, kind: input, shape index: {}]
  %s2 = inlined_call_operand.vmem [shape: f32[1,4], index: 2, kind: input, shape index: {}]
  %s3 = inlined_call_operand.vmem [shape: f32[8,4], index: 3, kind: output, shape index: {}]
  %s4 = sld [smem:[#allocation0]]
  $region30: #{tpu_custom_call.1} parent=0
    _
  %s6 = ssub.s32 1, %s4
  %s7 = scalar_select 0, %s6, %s4
  $region1: #{tpu_custom_call.1} parent=0
    #allocation2 [shape = 'u8[4096]{0}', space=vmem, size = 0x1000, scoped, tag = 'input window, operand 0, single buffered']
    #allocation3 [shape = 's32[1]{0}', space=sflag, size = 0x4, scoped, tag = 'scoped memory for tpu_custom_call.1']
    #allocation4 [shape = 'u8[2048]{0}', space=vmem, size = 0x800, scoped, tag = 'input window, operand 1, single buffered']
    #allocation5 [shape = 's32[1]{0}', space=sflag, size = 0x4, scoped, tag = 'scoped memory for tpu_custom_call.1']
    %8 = vsyncpa [#allocation3], 0
    %9 = vsyncpa [#allocation5], 0
    // Predicated region
    $region2: #{tpu_custom_call.1} parent=1 // pred_check
      _
    $region3: #{tpu_custom_call.1} parent=1 // pred_check_branch
      %11 = sbr.rel (0) target = $region5
    $region4: #{tpu_custom_call.1} parent=1 // pred_region
      %13 = vsyncadd [#allocation3], 0
      %s15 = sshll.u32 %s0, 4
      %s16 = int_to_ptr.hbm [resolvable:$true] %s15
      %s17 = sshll.u32 [#allocation2], 4
      %s18 = int_to_ptr.vmem [resolvable:$true] %s17
      %20 = dma.hbm_to_vmem [thread:$0]  %s16, 128, %s18, [#allocation3]
    $region5: #{tpu_custom_call.1} parent=1 // pred_fallthru
      _
    // Predicated region
    $region6: #{tpu_custom_call.1} parent=1 // pred_check
      _
    $region7: #{tpu_custom_call.1} parent=1 // pred_check_branch
      %22 = sbr.rel (0) target = $region9
    $region8: #{tpu_custom_call.1} parent=1 // pred_region
      %24 = vsyncadd [#allocation5], 0
      %s26 = sshll.u32 %s1, 4
      %s27 = int_to_ptr.hbm [resolvable:$true] %s26
      %s28 = sshll.u32 [#allocation4], 4
      %s29 = int_to_ptr.vmem [resolvable:$true] %s28
      %31 = dma.hbm_to_vmem [thread:$0]  %s27, 64, %s29, [#allocation5]
    $region9: #{tpu_custom_call.1} parent=1 // pred_fallthru
      _
    // Predicated region
    $region10: #{tpu_custom_call.1} parent=1 // pred_check
      _
    $region11: #{tpu_custom_call.1} parent=1 // pred_check_branch
      %33 = sbr.rel (0) target = $region13
    $region12: #{tpu_custom_call.1} parent=1 // pred_region
      _
    $region13: #{tpu_custom_call.1} parent=1 // pred_fallthru
      _
    // Predicated region
    $region14: #{tpu_custom_call.1} parent=1 // pred_check
      _
    $region15: #{tpu_custom_call.1} parent=1 // pred_check_branch
      %35 = sbr.rel (0) target = $region17
    $region16: #{tpu_custom_call.1} parent=1 // pred_region
      %37 = dma.done [#allocation3], 128
    $region17: #{tpu_custom_call.1} parent=1 // pred_fallthru
      _
    // Predicated region
    $region18: #{tpu_custom_call.1} parent=1 // pred_check
      _
    $region19: #{tpu_custom_call.1} parent=1 // pred_check_branch
      %39 = sbr.rel (0) target = $region21
    $region20: #{tpu_custom_call.1} parent=1 // pred_region
      %41 = dma.done [#allocation5], 64
    $region21: #{tpu_custom_call.1} parent=1 // pred_fallthru
      _
    %v42 = vld [vmem:[#allocation2] sm:$0xff]
    %v43 = vld [vmem:[#allocation4] sm:$0xf]
    %v44 = vld [vmem:[%s2] sm:$0x1]
    %v46 = vperm.slane %v44, 0
    %vm48 = vcmask 261120
    %v50 = vsel %vm48, %v42, 0
    %v53 = vsel %vm48, %v43, 0
    %55 = vmatpush.xpose.msra.mxu0 0.0
    %56 = vmatpush.xpose.msra.mxu0 0.0
    %57 = vmatpush.xpose.msra.mxu0 0.0
    %58 = vmatpush.xpose.msra.mxu0 0.0
    %59 = vmatpush.xpose.msra.mxu0 0.0
    %60 = vmatpush.xpose.msra.mxu0 0.0
    %61 = vmatpush.xpose.msra.mxu0 0.0
    %62 = vmatpush.xpose.msra.mxu0 0.0
    %63 = vmatpush.xpose.msra.mxu0 0.0
    %64 = vmatpush.xpose.msra.mxu0 0.0
    %65 = vmatpush.xpose.msra.mxu0 0.0
    %66 = vmatpush.xpose.msra.mxu0 0.0
    %67 = vmatpush.xpose.msra.mxu0 0.0
    %68 = vmatpush.xpose.msra.mxu0 0.0
    %69 = vmatpush.xpose.msra.mxu0 0.0
    %70 = vmatpush.xpose.msra.mxu0 %v53
    %71 = vmatmul.f32.gmra.mxu0 %v50
    %v72 = vpop.f32.mrf.mxu0
    %v73 = vadd.f32 %v46, %v72
    %74 = vdwg.mxu0
    %v75 = vxor.u32 %v73, 2147483648
    %v76 = vmul.f32 %v75, 1.442695
    %v77 = vpow.pop %v76
    %v78 = vadd.f32 %v77, 1.0
    %v79 = vrcp.pop %v78
    %v80 = vmul.f32 %v78, %v79
    %v81 = vsub.f32 1.0, %v80
    %v82 = vmul.f32 %v79, %v81
    %v83 = vadd.f32 %v79, %v82
    %vm84 = vweird.f32 %v78
    %vm85 = vweird.f32 %v79
    %vm86 = vmor %vm84, %vm85
    %v87 = vsel %vm86, %v79, %v83
    %v88 = vand.u32 2147483647, %v78
    %vm89 = vcmp.eq.f32.partialorder %v88, 8.507059e+37
    %v90 = vand.u32 %v78, 2147483648
    %v91 = vor.u32 1.1754944e-38, %v90
    %v92 = vsel %vm89, %v91, %v87
    %v93 = vmul.f32 1.0, %v92
    %vm94 = vcmask 31744
    %95 = vst.msk [vmem:[%s3] sm:$0xff] %vm94, %v93
    // Predicated region
    $region22: #{tpu_custom_call.1} parent=1 // pred_check
      _
    $region23: #{tpu_custom_call.1} parent=1 // pred_check_branch
      %97 = sbr.rel (0) target = $region25
    $region24: #{tpu_custom_call.1} parent=1 // pred_region
      _
    $region25: #{tpu_custom_call.1} parent=1 // pred_fallthru
      _
    // Predicated region
    $region26: #{tpu_custom_call.1} parent=1 // pred_check
      _
    $region27: #{tpu_custom_call.1} parent=1 // pred_check_branch
      %99 = sbr.rel (0) target = $region29
    $region28: #{tpu_custom_call.1} parent=1 // pred_region
      _
    $region29: #{tpu_custom_call.1} parent=1 // pred_fallthru
      _
    %100 = vsyncpa [#allocation3], 1
    %101 = vsyncpa [#allocation5], 1

</llo_original>
